<compile_context>
chip_gen: v7x
topology: tpu7x:2x2x1
jax: 0.10.0
libtpu: 0.0.40
codegen_flags: <defaults>
</compile_context>

<pallas_src>
import functools

import numpy as np
import jax
import jax.numpy as jnp
from jax.experimental import pallas as pl
from jax.experimental.pallas import tpu as pltpu


def _round_up(x, m):
    return ((x + m - 1) // m) * m


# ----------------------------------------------------------------------------
# Pallas kernel: (concatenated one-hot) @ G_flat -> tanh -> fc2 -> log_softmax
# ----------------------------------------------------------------------------
def qaff_kernel(tok_ref, g_ref, b1_ref, w2_ref, b2_ref, o_ref):
    tb, lv = tok_ref.shape                 # (batch tile, L*voc padded to 128)

    # Single vectorized compare: tok_ref already holds token + position*voc,
    # repeated voc times per position, so lane index k matches iff
    # k == tokens[:, k // voc] + (k // voc) * voc  (the concatenated one-hot).
    lane = jax.lax.broadcasted_iota(jnp.int32, (tb, lv), 1)
    oh = (tok_ref[...] == lane).astype(jnp.float32)                  # (tb, LV)

    # fc1 fused with the embedding lookup: one full-depth MXU matmul.
    acc = jnp.dot(oh, g_ref[...], preferred_element_type=jnp.float32)
    h = jnp.tanh(acc + b1_ref[...])

    # fc2 (lane-padded to 128 outputs; padded b2 lanes hold -1e30, padded W2
    # columns are 0, so no in-kernel masking is needed before the softmax).
    logits = jnp.dot(h, w2_ref[...], preferred_element_type=jnp.float32) + b2_ref[...]

    # numerically stable log_softmax over the last (lane) dim
    m = jnp.max(logits, axis=-1, keepdims=True)
    z = logits - m
    lse = jnp.log(jnp.sum(jnp.exp(z), axis=-1, keepdims=True))
    o_ref[...] = z - lse


def _qaff_pallas_call(tok_rep, g_flat, b1, w2p, b2p, *, tile_b):
    B_pad, LV = tok_rep.shape
    H = g_flat.shape[1]
    O_PAD = w2p.shape[1]
    grid = (B_pad // tile_b,)

    return pl.pallas_call(
        qaff_kernel,
        out_shape=jax.ShapeDtypeStruct((B_pad, O_PAD), jnp.float32),
        grid=grid,
        in_specs=[
            pl.BlockSpec((tile_b, LV), lambda i: (i, 0)),    # tokens (batch-tiled)
            pl.BlockSpec((LV, H), lambda i: (0, 0)),         # G_flat: VMEM-resident
            pl.BlockSpec((1, H), lambda i: (0, 0)),          # b1
            pl.BlockSpec((H, O_PAD), lambda i: (0, 0)),      # W2 (lane-padded)
            pl.BlockSpec((1, O_PAD), lambda i: (0, 0)),      # b2 (lane-padded, -1e30)
        ],
        out_specs=pl.BlockSpec((tile_b, O_PAD), lambda i: (i, 0)),
        compiler_params=pltpu.CompilerParams(
            dimension_semantics=("parallel",)),
    )(tok_rep, g_flat, b1, w2p, b2p)


# ----------------------------------------------------------------------------
# Parameter construction / one-time folding (plain JAX, done once)
# ----------------------------------------------------------------------------
def init_params(key, voc_size, emb, s_len, q_len, output_size):
    d1 = emb * (s_len + q_len)
    fc1o = int(np.floor(0.5 * emb * (q_len + s_len)))
    k = jax.random.split(key, 4)

    # embeddings ~ N(0, 1) like nn.Embedding default
    story_emb = jax.random.normal(k[0], (voc_size, emb), jnp.float32)
    query_emb = jax.random.normal(k[1], (voc_size, emb), jnp.float32)

    # xavier_uniform with gain sqrt(2); weights stored as (in, out)
    def xavier(key, fan_in, fan_out, gain):
        bound = gain * np.sqrt(6.0 / (fan_in + fan_out))
        return jax.random.uniform(key, (fan_in, fan_out), jnp.float32,
                                  minval=-bound, maxval=bound)

    w1 = xavier(k[2], d1, fc1o, np.sqrt(2.0))
    b1 = jnp.full((1, fc1o), 0.1, jnp.float32)
    w2 = xavier(k[3], fc1o, output_size, np.sqrt(2.0))
    b2 = jnp.full((1, output_size), 0.1, jnp.float32)

    return dict(story_emb=story_emb, query_emb=query_emb,
                w1=w1, b1=b1, w2=w2, b2=b2)


def prepare_params(params, s_len, q_len):
    """One-time, parameter-only folding + padding (hoisted out of the call path).

    G_flat[p*voc + v, :] = table_p[v, :] @ W1[p*emb:(p+1)*emb, :], so
    one_hot(concat_tokens) @ G_flat == concat(embed(story), embed(query)) @ W1.
    """
    voc, emb = params["story_emb"].shape
    H = params["w1"].shape[1]
    L = s_len + q_len

    w1r = params["w1"].reshape(L, emb, H)
    g = jnp.concatenate([
        jnp.einsum("ve,peh->pvh", params["story_emb"], w1r[:s_len]),
        jnp.einsum("ve,peh->pvh", params["query_emb"], w1r[s_len:]),
    ], axis=0)                                            # (L, voc, H)
    g_flat = g.reshape(L * voc, H)
    LV_pad = _round_up(L * voc, 128)
    g_flat = jnp.pad(g_flat, ((0, LV_pad - L * voc), (0, 0)))

    O = params["w2"].shape[1]
    O_PAD = _round_up(max(O, 1), 128)
    w2p = jnp.pad(params["w2"], ((0, 0), (0, O_PAD - O)))
    # padded output lanes masked via the bias: 0 (W2 cols) + (-1e30) = -1e30
    b2p = jnp.pad(params["b2"], ((0, 0), (0, O_PAD - O)),
                  constant_values=-1e30)

    return dict(g_flat=g_flat, b1=params["b1"], w2p=w2p, b2p=b2p)


# ----------------------------------------------------------------------------
# Jitted per-call forward (token prep + pallas_call + slice fuse in one dispatch)
# ----------------------------------------------------------------------------
@functools.partial(jax.jit, static_argnames=("voc", "o_valid", "tile_b"))
def qaff_apply(prepared, story, query, *, voc, o_valid, tile_b=None):
    B = story.shape[0]
    tokens = jnp.concatenate([story, query], axis=1).astype(jnp.int32)  # (B, L)
    L = tokens.shape[1]

    # offset tokens by position*voc and repeat along lanes -> (B, L*voc)
    offsets = (jnp.arange(L, dtype=jnp.int32) * voc)[None, :]
    tok_rep = jnp.repeat(tokens + offsets, voc, axis=1)

    LV_pad = prepared["g_flat"].shape[0]

    # batch tile: multiple of 8 sublanes, capped at 512 rows, and chosen so the
    # grid has >= 2 steps once B >= 16 (megacore sharding on v7x).
    if tile_b is None:
        tile_b = min(512, _round_up(max((B + 1) // 2, 1), 8))
    B_pad = _round_up(max(B, tile_b), tile_b)

    # lane-pad with -1 (never equals a lane index -> zero one-hot contribution)
    tok_rep = jnp.pad(tok_rep,
                      ((0, B_pad - B), (0, LV_pad - L * voc)),
                      constant_values=-1)

    out = _qaff_pallas_call(tok_rep, prepared["g_flat"], prepared["b1"],
                            prepared["w2p"], prepared["b2p"], tile_b=tile_b)
    return out[:B, :o_valid]


def qaff_model_forward(prepared, story, query, story_lengths=None,
                       query_lengths=None, *, voc, o_valid):
    """Matches QAFFModel.forward (lengths are unused by the reference model)."""
    return qaff_apply(prepared, story, query, voc=voc, o_valid=o_valid)


# pure-JAX reference following the original torch forward exactly
def reference_forward(params, story, query):
    B = story.shape[0]
    s_e = jnp.take(params["story_emb"], story, axis=0).reshape(B, -1)
    q_e = jnp.take(params["query_emb"], query, axis=0).reshape(B, -1)
    merged = jnp.concatenate([s_e, q_e], axis=1)
    h = jnp.tanh(merged @ params["w1"] + params["b1"])
    logits = h @ params["w2"] + params["b2"]
    return jax.nn.log_softmax(logits, axis=-1)


# ----------------------------------------------------------------------------
if __name__ == "__main__":
    voc_size = 32       # input_size / output_size (dictionary size)
    emb = 8             # embedding_size
    s_len = 10
    q_len = 6
    output_size = voc_size
    B = 4

    key = jax.random.PRNGKey(0)
    kp, ks, kq = jax.random.split(key, 3)

    params = init_params(kp, voc_size, emb, s_len, q_len, output_size)
    prepared = prepare_params(params, s_len, q_len)   # one-time parameter fold

    story = jax.random.randint(ks, (B, s_len), 0, voc_size, jnp.int32)
    query = jax.random.randint(kq, (B, q_len), 0, voc_size, jnp.int32)
    story_lengths = jnp.full((B,), s_len, jnp.int32)   # unused (parity with torch API)
    query_lengths = jnp.full((B,), q_len, jnp.int32)

    out = qaff_model_forward(prepared, story, query, story_lengths, query_lengths,
                             voc=voc_size, o_valid=output_size)
    out = jax.block_until_ready(out)

    # correctness: match the plain-JAX (== PyTorch) forward pass
    ref = jax.block_until_ready(reference_forward(params, story, query))
    assert out.shape == (B, output_size)
    assert np.allclose(np.asarray(out), np.asarray(ref), atol=1e-4, rtol=1e-4)
    # sanity: rows of log_softmax should exp-sum to 1
    assert np.allclose(np.exp(np.asarray(out)).sum(-1), 1.0, atol=1e-4)

    print("KERNEL_OK")
</pallas_src>

<mosaic_0001>
module attributes {stable_mosaic.version = 11 : i64} {
  func.func @qaff_kernel(%arg0: i32, %arg1: memref<8x512xi32, #tpu.memory_space<vmem>>, %arg2: memref<512x64xf32, #tpu.memory_space<vmem>>, %arg3: memref<1x64xf32, #tpu.memory_space<vmem>>, %arg4: memref<64x128xf32, #tpu.memory_space<vmem>>, %arg5: memref<1x128xf32, #tpu.memory_space<vmem>>, %arg6: memref<8x128xf32, #tpu.memory_space<vmem>>) attributes {dimension_semantics = [#tpu.dimension_semantics<parallel>], iteration_bounds = array<i64: 1>, scalar_prefetch = 0 : i64, scratch_operands = 0 : i64, tpu.core_type = #tpu.core_type<tc>, window_params = [{transform_indices = @transform_0, window_bounds = array<i64: 8, 512>}, {pipeline_mode = #tpu.pipeline_mode<synchronous>, transform_indices = @transform_1, window_bounds = array<i64: 512, 64>}, {pipeline_mode = #tpu.pipeline_mode<synchronous>, transform_indices = @transform_2, window_bounds = array<i64: 1, 64>}, {pipeline_mode = #tpu.pipeline_mode<synchronous>, transform_indices = @transform_3, window_bounds = array<i64: 64, 128>}, {pipeline_mode = #tpu.pipeline_mode<synchronous>, transform_indices = @transform_4, window_bounds = array<i64: 1, 128>}, {transform_indices = @transform_5, window_bounds = array<i64: 8, 128>}]} {
    %0 = tpu.iota {dimensions = array<i32: 1>} : vector<8x512xi32>
    %c0 = arith.constant 0 : index
    %c0_0 = arith.constant 0 : index
    %1 = vector.load %arg1[%c0, %c0_0] : memref<8x512xi32, #tpu.memory_space<vmem>>, vector<8x512xi32>
    %2 = arith.cmpi eq, %1, %0 : vector<8x512xi32>
    %3 = arith.extui %2 : vector<8x512xi1> to vector<8x512xi32>
    %4 = arith.sitofp %3 : vector<8x512xi32> to vector<8x512xf32>
    %c0_1 = arith.constant 0 : index
    %c0_2 = arith.constant 0 : index
    %5 = vector.load %arg2[%c0_1, %c0_2] : memref<512x64xf32, #tpu.memory_space<vmem>>, vector<512x64xf32>
    %cst = arith.constant dense<0.000000e+00> : vector<8x64xf32>
    %6 = tpu.matmul %4, %5, %cst {dimension_numbers = #tpu.dot_dimension_numbers<[1], [0], [0], [1], [0, 0, 1, 1], [], []>} : vector<8x512xf32>, vector<512x64xf32>, vector<8x64xf32> -> vector<8x64xf32>
    %c0_3 = arith.constant 0 : index
    %c0_4 = arith.constant 0 : index
    %7 = vector.load %arg3[%c0_3, %c0_4] : memref<1x64xf32, #tpu.memory_space<vmem>>, vector<1x64xf32>
    %8 = vector.broadcast %7 : vector<1x64xf32> to vector<8x64xf32>
    %9 = arith.addf %6, %8 : vector<8x64xf32>
    %10 = math.tanh %9 : vector<8x64xf32>
    %c0_5 = arith.constant 0 : index
    %c0_6 = arith.constant 0 : index
    %11 = vector.load %arg4[%c0_5, %c0_6] : memref<64x128xf32, #tpu.memory_space<vmem>>, vector<64x128xf32>
    %cst_7 = arith.constant dense<0.000000e+00> : vector<8x128xf32>
    %12 = tpu.matmul %10, %11, %cst_7 {dimension_numbers = #tpu.dot_dimension_numbers<[1], [0], [0], [1], [0, 0, 1, 1], [], []>} : vector<8x64xf32>, vector<64x128xf32>, vector<8x128xf32> -> vector<8x128xf32>
    %c0_8 = arith.constant 0 : index
    %c0_9 = arith.constant 0 : index
    %13 = vector.load %arg5[%c0_8, %c0_9] : memref<1x128xf32, #tpu.memory_space<vmem>>, vector<1x128xf32>
    %14 = vector.broadcast %13 : vector<1x128xf32> to vector<8x128xf32>
    %15 = arith.addf %12, %14 : vector<8x128xf32>
    %cst_10 = arith.constant dense<0xFF800000> : vector<8xf32>
    %16 = vector.multi_reduction <maximumf>, %15, %cst_10 [1] : vector<8x128xf32> to vector<8xf32>
    %17 = vector.shape_cast %16 : vector<8xf32> to vector<8x1xf32>
    %18 = vector.broadcast %17 : vector<8x1xf32> to vector<8x128xf32>
    %19 = arith.subf %15, %18 : vector<8x128xf32>
    %20 = math.exp %19 : vector<8x128xf32>
    %cst_11 = arith.constant dense<0.000000e+00> : vector<8xf32>
    %21 = vector.multi_reduction <add>, %20, %cst_11 [1] : vector<8x128xf32> to vector<8xf32>
    %22 = vector.shape_cast %21 : vector<8xf32> to vector<8x1xf32>
    %23 = math.log %22 : vector<8x1xf32>
    %24 = vector.broadcast %23 : vector<8x1xf32> to vector<8x128xf32>
    %25 = arith.subf %19, %24 : vector<8x128xf32>
    %c0_12 = arith.constant 0 : index
    %c0_13 = arith.constant 0 : index
    %26 = vector.load %arg6[%c0_12, %c0_13] : memref<8x128xf32, #tpu.memory_space<vmem>>, vector<8x128xf32>
    tpu.vector_store %arg6[%c0_12, %c0_13], %25 {strides = array<i32>} : memref<8x128xf32, #tpu.memory_space<vmem>>, vector<8x128xf32>,
    return
  }
  func.func @transform_0(%arg0: i32) -> (i32, i32) {
    %c0_i32 = arith.constant 0 : i32
    %c0_i32_0 = arith.constant 0 : i32
    return %arg0, %c0_i32 : i32, i32
  }
  func.func @transform_1(%arg0: i32) -> (i32, i32) {
    %c0_i32 = arith.constant 0 : i32
    %c0_i32_0 = arith.constant 0 : i32
    %c0_i32_1 = arith.constant 0 : i32
    return %c0_i32, %c0_i32_0 : i32, i32
  }
  func.func @transform_2(%arg0: i32) -> (i32, i32) {
    %c0_i32 = arith.constant 0 : i32
    %c0_i32_0 = arith.constant 0 : i32
    %c0_i32_1 = arith.constant 0 : i32
    return %c0_i32, %c0_i32_0 : i32, i32
  }
  func.func @transform_3(%arg0: i32) -> (i32, i32) {
    %c0_i32 = arith.constant 0 : i32
    %c0_i32_0 = arith.constant 0 : i32
    %c0_i32_1 = arith.constant 0 : i32
    return %c0_i32, %c0_i32_0 : i32, i32
  }
  func.func @transform_4(%arg0: i32) -> (i32, i32) {
    %c0_i32 = arith.constant 0 : i32
    %c0_i32_0 = arith.constant 0 : i32
    %c0_i32_1 = arith.constant 0 : i32
    return %c0_i32, %c0_i32_0 : i32, i32
  }
  func.func @transform_5(%arg0: i32) -> (i32, i32) {
    %c0_i32 = arith.constant 0 : i32
    %c0_i32_0 = arith.constant 0 : i32
    return %arg0, %c0_i32 : i32, i32
  }
}

</mosaic_0001>

<llo_original>
// kernel: qaff_apply.1
$region0: #{qaff_apply.1}
  #allocation0 [shape = 'u32[]', space=smem, size = 0x4, offset = 0x4, fixed_abs, tag = 'smem constant byte address 0x4 - core index']
  #allocation1 [shape = 'u32[144,128]{1,0:T(1,128)}', space=vmem, size = 0x12000, scoped, tag = 'internal scratch']
  %s0 = inlined_call_operand.vmem [shape: s32[8,512], index: 0, kind: input, shape index: {}]
  %s1 = inlined_call_operand.vmem [shape: f32[512,64], index: 1, kind: input, shape index: {}]
  %s2 = inlined_call_operand.vmem [shape: f32[1,64], index: 2, kind: input, shape index: {}]
  %s3 = inlined_call_operand.vmem [shape: f32[64,128], index: 3, kind: input, shape index: {}]
  %s4 = inlined_call_operand.vmem [shape: f32[1,128], index: 4, kind: input, shape index: {}]
  %s5 = inlined_call_operand.vmem [shape: f32[8,128], index: 5, kind: output, shape index: {}]
  %s6 = sld [smem:[#allocation0]]
  $region30: #{qaff_apply.1} parent=0
    _
  %s8 = ssub.s32 1, %s6
  %s9 = scalar_select 0, %s8, %s6
  // Predicated region
  $region2: #{qaff_apply.1} parent=0 // pred_check
    _
  $region3: #{qaff_apply.1} parent=0 // pred_check_branch
    %11 = sbr.rel (0) target = $region5
  $region4: #{qaff_apply.1} parent=0 // pred_region
    _
  $region5: #{qaff_apply.1} parent=0 // pred_fallthru
    _
  // Predicated region
  $region6: #{qaff_apply.1} parent=0 // pred_check
    _
  $region7: #{qaff_apply.1} parent=0 // pred_check_branch
    %13 = sbr.rel (0) target = $region9
  $region8: #{qaff_apply.1} parent=0 // pred_region
    _
  $region9: #{qaff_apply.1} parent=0 // pred_fallthru
    _
  // Predicated region
  $region10: #{qaff_apply.1} parent=0 // pred_check
    _
  $region11: #{qaff_apply.1} parent=0 // pred_check_branch
    %15 = sbr.rel (0) target = $region13
  $region12: #{qaff_apply.1} parent=0 // pred_region
    _
  $region13: #{qaff_apply.1} parent=0 // pred_fallthru
    _
  // Predicated region
  $region14: #{qaff_apply.1} parent=0 // pred_check
    _
  $region15: #{qaff_apply.1} parent=0 // pred_check_branch
    %17 = sbr.rel (0) target = $region17
  $region16: #{qaff_apply.1} parent=0 // pred_region
    _
  $region17: #{qaff_apply.1} parent=0 // pred_fallthru
    _
  // Predicated region
  $region18: #{qaff_apply.1} parent=0 // pred_check
    _
  $region19: #{qaff_apply.1} parent=0 // pred_check_branch
    %19 = sbr.rel (0) target = $region21
  $region20: #{qaff_apply.1} parent=0 // pred_region
    _
  $region21: #{qaff_apply.1} parent=0 // pred_fallthru
    _
  %v20 = vlaneseq
  %v21 = vand.u32 %v20, 127
  %v22 = vadd.s32 %v21, 128
  %v23 = vadd.s32 %v21, 256
  %v24 = vadd.s32 %v21, 384
  %v25 = vld [vmem:[%s0] sm:$0xff]
  %v26 = vld [vmem:[%s0 + $0x8] sm:$0xff]
  %v27 = vld [vmem:[%s0 + $0x10] sm:$0xff]
  %v28 = vld [vmem:[%s0 + $0x18] sm:$0xff]
  %vm29 = vcmp.eq.s32.totalorder %v25, %v21
  %vm30 = vcmp.eq.s32.totalorder %v26, %v22
  %vm31 = vcmp.eq.s32.totalorder %v27, %v23
  %vm32 = vcmp.eq.s32.totalorder %v28, %v24
  %v33 = vsel %vm29, 1, 0
  %v34 = vsel %vm30, 1, 0
  %v35 = vsel %vm31, 1, 0
  %v36 = vsel %vm32, 1, 0
  %v37 = vcvt.s32.f32 %v33
  %v38 = vcvt.s32.f32 %v34
  %v39 = vcvt.s32.f32 %v35
  %v40 = vcvt.s32.f32 %v36
  %v41 = vld [vmem:[%s1] sm:$0xff]
  %v42 = vld [vmem:[%s1 + $0x8] sm:$0xff]
  %v43 = vld [vmem:[%s1 + $0x10] sm:$0xff]
  %v44 = vld [vmem:[%s1 + $0x18] sm:$0xff]
  %v45 = vld [vmem:[%s1 + $0x20] sm:$0xff]
  %v46 = vld [vmem:[%s1 + $0x28] sm:$0xff]
  %v47 = vld [vmem:[%s1 + $0x30] sm:$0xff]
  %v48 = vld [vmem:[%s1 + $0x38] sm:$0xff]
  %v49 = vld [vmem:[%s1 + $0x40] sm:$0xff]
  %v50 = vld [vmem:[%s1 + $0x48] sm:$0xff]
  %v51 = vld [vmem:[%s1 + $0x50] sm:$0xff]
  %v52 = vld [vmem:[%s1 + $0x58] sm:$0xff]
  %v53 = vld [vmem:[%s1 + $0x60] sm:$0xff]
  %v54 = vld [vmem:[%s1 + $0x68] sm:$0xff]
  %v55 = vld [vmem:[%s1 + $0x70] sm:$0xff]
  %v56 = vld [vmem:[%s1 + $0x78] sm:$0xff]
  %v57 = vld [vmem:[%s1 + $0x80] sm:$0xff]
  %v58 = vld [vmem:[%s1 + $0x88] sm:$0xff]
  %v59 = vld [vmem:[%s1 + $0x90] sm:$0xff]
  %v60 = vld [vmem:[%s1 + $0x98] sm:$0xff]
  %v61 = vld [vmem:[%s1 + $0xa0] sm:$0xff]
  %v62 = vld [vmem:[%s1 + $0xa8] sm:$0xff]
  %v63 = vld [vmem:[%s1 + $0xb0] sm:$0xff]
  %v64 = vld [vmem:[%s1 + $0xb8] sm:$0xff]
  %v65 = vld [vmem:[%s1 + $0xc0] sm:$0xff]
  %v66 = vld [vmem:[%s1 + $0xc8] sm:$0xff]
  %v67 = vld [vmem:[%s1 + $0xd0] sm:$0xff]
  %v68 = vld [vmem:[%s1 + $0xd8] sm:$0xff]
  %v69 = vld [vmem:[%s1 + $0xe0] sm:$0xff]
  %v70 = vld [vmem:[%s1 + $0xe8] sm:$0xff]
  %v71 = vld [vmem:[%s1 + $0xf0] sm:$0xff]
  %v72 = vld [vmem:[%s1 + $0xf8] sm:$0xff]
  %v73 = vld [vmem:[%s1 + $0x100] sm:$0xff]
  %v74 = vld [vmem:[%s1 + $0x108] sm:$0xff]
  %v75 = vld [vmem:[%s1 + $0x110] sm:$0xff]
  %v76 = vld [vmem:[%s1 + $0x118] sm:$0xff]
  %v77 = vld [vmem:[%s1 + $0x120] sm:$0xff]
  %v78 = vld [vmem:[%s1 + $0x128] sm:$0xff]
  %v79 = vld [vmem:[%s1 + $0x130] sm:$0xff]
  %v80 = vld [vmem:[%s1 + $0x138] sm:$0xff]
  %v81 = vld [vmem:[%s1 + $0x140] sm:$0xff]
  %v82 = vld [vmem:[%s1 + $0x148] sm:$0xff]
  %v83 = vld [vmem:[%s1 + $0x150] sm:$0xff]
  %v84 = vld [vmem:[%s1 + $0x158] sm:$0xff]
  %v85 = vld [vmem:[%s1 + $0x160] sm:$0xff]
  %v86 = vld [vmem:[%s1 + $0x168] sm:$0xff]
  %v87 = vld [vmem:[%s1 + $0x170] sm:$0xff]
  %v88 = vld [vmem:[%s1 + $0x178] sm:$0xff]
  %v89 = vld [vmem:[%s1 + $0x180] sm:$0xff]
  %v90 = vld [vmem:[%s1 + $0x188] sm:$0xff]
  %v91 = vld [vmem:[%s1 + $0x190] sm:$0xff]
  %v92 = vld [vmem:[%s1 + $0x198] sm:$0xff]
  %v93 = vld [vmem:[%s1 + $0x1a0] sm:$0xff]
  %v94 = vld [vmem:[%s1 + $0x1a8] sm:$0xff]
  %v95 = vld [vmem:[%s1 + $0x1b0] sm:$0xff]
  %v96 = vld [vmem:[%s1 + $0x1b8] sm:$0xff]
  %v97 = vld [vmem:[%s1 + $0x1c0] sm:$0xff]
  %v98 = vld [vmem:[%s1 + $0x1c8] sm:$0xff]
  %v99 = vld [vmem:[%s1 + $0x1d0] sm:$0xff]
  %v100 = vld [vmem:[%s1 + $0x1d8] sm:$0xff]
  %v101 = vld [vmem:[%s1 + $0x1e0] sm:$0xff]
  %v102 = vld [vmem:[%s1 + $0x1e8] sm:$0xff]
  %v103 = vld [vmem:[%s1 + $0x1f0] sm:$0xff]
  %v104 = vld [vmem:[%s1 + $0x1f8] sm:$0xff]
  %v105 = vld [vmem:[%s2] sm:$0x1]
  %v107 = vlaneseq
  %v108 = vshrl.u32 %v107, 7
  %v109 = vsub.s32 0, %v108
  %v110 = vrot.slane %v105, %v109
  %112 = vmatprep.subr.mxu0 0.0
  %113 = vmatpush1.msra.mxu0 %v41
  %114 = vmatprep.subr.mxu0 0.0
  %115 = vmatpush1.msra.mxu0 %v42
  %116 = vmatprep.subr.mxu0 0.0
  %117 = vmatpush1.msra.mxu0 %v43
  %118 = vmatprep.subr.mxu0 0.0
  %119 = vmatpush1.msra.mxu0 %v44
  %120 = vmatprep.subr.mxu0 0.0
  %121 = vmatpush1.msra.mxu0 %v45
  %122 = vmatprep.subr.mxu0 0.0
  %123 = vmatpush1.msra.mxu0 %v46
  %124 = vmatprep.subr.mxu0 0.0
  %125 = vmatpush1.msra.mxu0 %v47
  %126 = vmatprep.subr.mxu0 0.0
  %127 = vmatpush1.msra.mxu0 %v48
  %128 = vmatprep.subr.mxu0 0.0
  %129 = vmatpush1.msra.mxu0 %v49
  %130 = vmatprep.subr.mxu0 0.0
  %131 = vmatpush1.msra.mxu0 %v50
  %132 = vmatprep.subr.mxu0 0.0
  %133 = vmatpush1.msra.mxu0 %v51
  %134 = vmatprep.subr.mxu0 0.0
  %135 = vmatpush1.msra.mxu0 %v52
  %136 = vmatprep.subr.mxu0 0.0
  %137 = vmatpush1.msra.mxu0 %v53
  %138 = vmatprep.subr.mxu0 0.0
  %139 = vmatpush1.msra.mxu0 %v54
  %140 = vmatprep.subr.mxu0 0.0
  %141 = vmatpush1.msra.mxu0 %v55
  %142 = vmatprep.subr.mxu0 0.0
  %143 = vmatpush1.msra.mxu0 %v56
  %144 = vmatprep.subr.mxu0 0.0
  %145 = vmatpush1.msra.mxu0 %v57
  %146 = vmatprep.subr.mxu0 0.0
  %147 = vmatpush1.msra.mxu0 %v58
  %148 = vmatprep.subr.mxu0 0.0
  %149 = vmatpush1.msra.mxu0 %v59
  %150 = vmatprep.subr.mxu0 0.0
  %151 = vmatpush1.msra.mxu0 %v60
  %152 = vmatprep.subr.mxu0 0.0
  %153 = vmatpush1.msra.mxu0 %v61
  %154 = vmatprep.subr.mxu0 0.0
  %155 = vmatpush1.msra.mxu0 %v62
  %156 = vmatprep.subr.mxu0 0.0
  %157 = vmatpush1.msra.mxu0 %v63
  %158 = vmatprep.subr.mxu0 0.0
  %159 = vmatpush1.msra.mxu0 %v64
  %160 = vmatprep.subr.mxu0 0.0
  %161 = vmatpush1.msra.mxu0 %v65
  %162 = vmatprep.subr.mxu0 0.0
  %163 = vmatpush1.msra.mxu0 %v66
  %164 = vmatprep.subr.mxu0 0.0
  %165 = vmatpush1.msra.mxu0 %v67
  %166 = vmatprep.subr.mxu0 0.0
  %167 = vmatpush1.msra.mxu0 %v68
  %168 = vmatprep.subr.mxu0 0.0
  %169 = vmatpush1.msra.mxu0 %v69
  %170 = vmatprep.subr.mxu0 0.0
  %171 = vmatpush1.msra.mxu0 %v70
  %172 = vmatprep.subr.mxu0 0.0
  %173 = vmatpush1.msra.mxu0 %v71
  %174 = vmatprep.subr.mxu0 0.0
  %175 = vmatpush1.msra.mxu0 %v72
  %176 = vmatprep.mubr.f32.mxu0 %v38
  %177 = vmatmul.mubr.f32.gmra.mrb[0].mxu0 %v37
  %v178 = vpop.f32.mrb[0].mxu0
  %v179 = vadd.f32 %v110, %v178
  %v180 = vpop.f32.mrb[0].mxu0
  %181 = vdwg.mxu0
  %182 = vmatprep.subr.mxu0 0.0
  %183 = vmatpush1.msra.mxu0 %v73
  %184 = vmatprep.subr.mxu0 0.0
  %185 = vmatpush1.msra.mxu0 %v74
  %186 = vmatprep.subr.mxu0 0.0
  %187 = vmatpush1.msra.mxu0 %v75
  %188 = vmatprep.subr.mxu0 0.0
  %189 = vmatpush1.msra.mxu0 %v76
  %190 = vmatprep.subr.mxu0 0.0
  %191 = vmatpush1.msra.mxu0 %v77
  %192 = vmatprep.subr.mxu0 0.0
  %193 = vmatpush1.msra.mxu0 %v78
  %194 = vmatprep.subr.mxu0 0.0
  %195 = vmatpush1.msra.mxu0 %v79
  %196 = vmatprep.subr.mxu0 0.0
  %197 = vmatpush1.msra.mxu0 %v80
  %198 = vmatprep.subr.mxu0 0.0
  %199 = vmatpush1.msra.mxu0 %v81
  %200 = vmatprep.subr.mxu0 0.0
  %201 = vmatpush1.msra.mxu0 %v82
  %202 = vmatprep.subr.mxu0 0.0
  %203 = vmatpush1.msra.mxu0 %v83
  %204 = vmatprep.subr.mxu0 0.0
  %205 = vmatpush1.msra.mxu0 %v84
  %206 = vmatprep.subr.mxu0 0.0
  %207 = vmatpush1.msra.mxu0 %v85
  %208 = vmatprep.subr.mxu0 0.0
  %209 = vmatpush1.msra.mxu0 %v86
  %210 = vmatprep.subr.mxu0 0.0
  %211 = vmatpush1.msra.mxu0 %v87
  %212 = vmatprep.subr.mxu0 0.0
  %213 = vmatpush1.msra.mxu0 %v88
  %214 = vmatprep.subr.mxu0 0.0
  %215 = vmatpush1.msra.mxu0 %v89
  %216 = vmatprep.subr.mxu0 0.0
  %217 = vmatpush1.msra.mxu0 %v90
  %218 = vmatprep.subr.mxu0 0.0
  %219 = vmatpush1.msra.mxu0 %v91
  %220 = vmatprep.subr.mxu0 0.0
  %221 = vmatpush1.msra.mxu0 %v92
  %222 = vmatprep.subr.mxu0 0.0
  %223 = vmatpush1.msra.mxu0 %v93
  %224 = vmatprep.subr.mxu0 0.0
  %225 = vmatpush1.msra.mxu0 %v94
  %226 = vmatprep.subr.mxu0 0.0
  %227 = vmatpush1.msra.mxu0 %v95
  %228 = vmatprep.subr.mxu0 0.0
  %229 = vmatpush1.msra.mxu0 %v96
  %230 = vmatprep.subr.mxu0 0.0
  %231 = vmatpush1.msra.mxu0 %v97
  %232 = vmatprep.subr.mxu0 0.0
  %233 = vmatpush1.msra.mxu0 %v98
  %234 = vmatprep.subr.mxu0 0.0
  %235 = vmatpush1.msra.mxu0 %v99
  %236 = vmatprep.subr.mxu0 0.0
  %237 = vmatpush1.msra.mxu0 %v100
  %238 = vmatprep.subr.mxu0 0.0
  %239 = vmatpush1.msra.mxu0 %v101
  %240 = vmatprep.subr.mxu0 0.0
  %241 = vmatpush1.msra.mxu0 %v102
  %242 = vmatprep.subr.mxu0 0.0
  %243 = vmatpush1.msra.mxu0 %v103
  %244 = vmatprep.subr.mxu0 0.0
  %245 = vmatpush1.msra.mxu0 %v104
  %246 = vmatprep.mubr.f32.mxu0 %v40
  %247 = vmatmul.mubr.f32.gmra.mrb[0].mxu0 %v39
  %v248 = vpop.f32.mrb[0].mxu0
  %v249 = vadd.f32 %v179, %v248
  %v250 = vpop.f32.mrb[0].mxu0
  %251 = vdwg.mxu0
  %v252 = vtanh.pop %v249
  %v253 = vld [vmem:[%s3] sm:$0xff]
  %v254 = vld [vmem:[%s3 + $0x8] sm:$0xff]
  %v255 = vld [vmem:[%s3 + $0x10] sm:$0xff]
  %v256 = vld [vmem:[%s3 + $0x18] sm:$0xff]
  %v257 = vld [vmem:[%s3 + $0x20] sm:$0xff]
  %v258 = vld [vmem:[%s3 + $0x28] sm:$0xff]
  %v259 = vld [vmem:[%s3 + $0x30] sm:$0xff]
  %v260 = vld [vmem:[%s3 + $0x38] sm:$0xff]
  %v261 = vld [vmem:[%s4] sm:$0x1]
  %v263 = vlaneseq
  %v264 = vshrl.u32 %v263, 7
  %v265 = vsub.s32 0, %v264
  %v266 = vrot.slane %v261, %v265
  %vm268 = vcmask 523264
  %v270 = vsel %vm268, %v252, 0
  %272 = vmatprep.subr.mxu0 0.0
  %273 = vmatpush1.msra.mxu0 %v253
  %274 = vmatprep.subr.mxu0 0.0
  %275 = vmatpush1.msra.mxu0 %v254
  %276 = vmatprep.subr.mxu0 0.0
  %277 = vmatpush1.msra.mxu0 %v255
  %278 = vmatprep.subr.mxu0 0.0
  %279 = vmatpush1.msra.mxu0 %v256
  %280 = vmatprep.subr.mxu0 0.0
  %281 = vmatpush1.msra.mxu0 %v257
  %282 = vmatprep.subr.mxu0 0.0
  %283 = vmatpush1.msra.mxu0 %v258
  %284 = vmatprep.subr.mxu0 0.0
  %285 = vmatpush1.msra.mxu0 %v259
  %286 = vmatprep.subr.mxu0 0.0
  %287 = vmatpush1.msra.mxu0 %v260
  %288 = vmatprep.subr.mxu0 0.0
  %289 = vmatpush1.msra.mxu0 0.0
  %290 = vmatprep.subr.mxu0 0.0
  %291 = vmatpush1.msra.mxu0 0.0
  %292 = vmatprep.subr.mxu0 0.0
  %293 = vmatpush1.msra.mxu0 0.0
  %294 = vmatprep.subr.mxu0 0.0
  %295 = vmatpush1.msra.mxu0 0.0
  %296 = vmatprep.subr.mxu0 0.0
  %297 = vmatpush1.msra.mxu0 0.0
  %298 = vmatprep.subr.mxu0 0.0
  %299 = vmatpush1.msra.mxu0 0.0
  %300 = vmatprep.subr.mxu0 0.0
  %301 = vmatpush1.msra.mxu0 0.0
  %302 = vmatprep.subr.mxu0 0.0
  %303 = vmatpush1.msra.mxu0 0.0
  %304 = vmatprep.subr.mxu0 0.0
  %305 = vmatpush1.msra.mxu0 0.0
  %306 = vmatprep.subr.mxu0 0.0
  %307 = vmatpush1.msra.mxu0 0.0
  %308 = vmatprep.subr.mxu0 0.0
  %309 = vmatpush1.msra.mxu0 0.0
  %310 = vmatprep.subr.mxu0 0.0
  %311 = vmatpush1.msra.mxu0 0.0
  %312 = vmatprep.subr.mxu0 0.0
  %313 = vmatpush1.msra.mxu0 0.0
  %314 = vmatprep.subr.mxu0 0.0
  %315 = vmatpush1.msra.mxu0 0.0
  %316 = vmatprep.subr.mxu0 0.0
  %317 = vmatpush1.msra.mxu0 0.0
  %318 = vmatprep.subr.mxu0 0.0
  %319 = vmatpush1.msra.mxu0 0.0
  %320 = vmatprep.subr.mxu0 0.0
  %321 = vmatpush1.msra.mxu0 0.0
  %322 = vmatprep.subr.mxu0 0.0
  %323 = vmatpush1.msra.mxu0 0.0
  %324 = vmatprep.subr.mxu0 0.0
  %325 = vmatpush1.msra.mxu0 0.0
  %326 = vmatprep.subr.mxu0 0.0
  %327 = vmatpush1.msra.mxu0 0.0
  %328 = vmatprep.subr.mxu0 0.0
  %329 = vmatpush1.msra.mxu0 0.0
  %330 = vmatprep.subr.mxu0 0.0
  %331 = vmatpush1.msra.mxu0 0.0
  %332 = vmatprep.subr.mxu0 0.0
  %333 = vmatpush1.msra.mxu0 0.0
  %334 = vmatprep.subr.mxu0 0.0
  %335 = vmatpush1.msra.mxu0 0.0
  %336 = vmatprep.mubr.f32.mxu0 0.0
  %337 = vmatmul.mubr.f32.gmra.mrb[0].mxu0 %v270
  %v338 = vpop.f32.mrb[0].mxu0
  %v339 = vadd.f32 %v266, %v338
  %v340 = vpop.f32.mrb[0].mxu0
  %341 = vdwg.mxu0
  %342 = vmax.xlane.f32.xlu0 %v339
  %v343 = vpop.xlane.xlu0 %342
  %v344 = vsub.f32 %v339, %v343
  %v345 = vmul.f32 %v344, 1.442695
  %v346 = vpow.pop %v345
  %347 = vadd.xlane.f32.xlu0 %v346
  %v348 = vpop.xlane.xlu0 %347
  %v349 = vlog2.pop %v348
  %v350 = vmul.f32 %v349, 0.6931472
  %v351 = vsub.f32 %v344, %v350
  %352 = vst [vmem:[%s5] sm:$0xff] %v351
  // Predicated region
  $region22: #{qaff_apply.1} parent=0 // pred_check
    _
  $region23: #{qaff_apply.1} parent=0 // pred_check_branch
    %354 = sbr.rel (0) target = $region25
  $region24: #{qaff_apply.1} parent=0 // pred_region
    _
  $region25: #{qaff_apply.1} parent=0 // pred_fallthru
    _
  // Predicated region
  $region26: #{qaff_apply.1} parent=0 // pred_check
    _
  $region27: #{qaff_apply.1} parent=0 // pred_check_branch
    %356 = sbr.rel (0) target = $region29
  $region28: #{qaff_apply.1} parent=0 // pred_region
    _
  $region29: #{qaff_apply.1} parent=0 // pred_fallthru
    _

</llo_original>
